<compile_context>
chip_gen: v6e
topology: v6e:2x2x1
jax: 0.10.0
libtpu: 0.0.40
codegen_flags: <defaults>
</compile_context>

<pallas_src>
import jax
import jax.numpy as jnp
from jax.experimental import pallas as pl
from jax.experimental.pallas import tpu as pltpu

_LANE = 128            # TPU lane width: keep the last dim lane-dense
_MAX_TILE_ROWS = 512   # ~85% of HBM roofline for f32 elementwise at 512-row tiles


def _identity_kernel(x_ref, o_ref):
    # Straight VMEM-resident copy of one (tile_rows, 128) block.
    o_ref[...] = x_ref[...]


def pallas_identity(x):
    """Identity forward pass via a tiled, lane-dense Pallas copy kernel."""
    orig_shape = x.shape
    total = x.size
    if total == 0:
        return x

    # Flatten and pad the element count up to a multiple of the lane width so
    # the kernel always sees a lane-dense (rows, 128) slab.
    rows = -(-total // _LANE)
    flat = x.reshape(-1)
    pad_elems = rows * _LANE - total
    if pad_elems:
        flat = jnp.pad(flat, (0, pad_elems))

    # Row-tile size: big enough to amortize per-grid-step overhead (~0.35 us)
    # and keep DMA/compute overlapped, small enough that double-buffered
    # input+output tiles (4 * tile bytes) fit comfortably in VMEM on every
    # generation (512 * 128 * 4 B = 256 KiB per buffer).
    tile_rows = min(_MAX_TILE_ROWS, max(8, rows))
    padded_rows = -(-rows // tile_rows) * tile_rows
    x2d = flat.reshape(rows, _LANE)
    if padded_rows != rows:
        x2d = jnp.pad(x2d, ((0, padded_rows - rows), (0, 0)))

    out2d = pl.pallas_call(
        _identity_kernel,
        out_shape=jax.ShapeDtypeStruct((padded_rows, _LANE), x2d.dtype),
        grid=(padded_rows // tile_rows,),
        in_specs=[pl.BlockSpec((tile_rows, _LANE), lambda i: (i, 0))],
        out_specs=pl.BlockSpec((tile_rows, _LANE), lambda i: (i, 0)),
        compiler_params=pltpu.CompilerParams(
            dimension_semantics=("parallel",)),
    )(x2d)

    return out2d.reshape(-1)[:total].reshape(orig_shape)


if __name__ == "__main__":
    # Small 3D-model style input (NCDHW), deterministic.
    key = jax.random.PRNGKey(0)
    x = jax.random.normal(key, (2, 4, 8, 16, 16), jnp.float32)

    out = pallas_identity(x)
    out = jax.block_until_ready(out)

    assert out.shape == x.shape, out.shape
    assert out.dtype == x.dtype, out.dtype
    # Identity must be bit-exact.
    assert bool(jnp.array_equal(out, x)), float(jnp.max(jnp.abs(out - x)))

    print("KERNEL_OK")
</pallas_src>

<mosaic_0001>
module attributes {stable_mosaic.version = 11 : i64} {
  func.func @_identity_kernel(%arg0: i32, %arg1: memref<128x128xf32, #tpu.memory_space<vmem>>, %arg2: memref<128x128xf32, #tpu.memory_space<vmem>>) attributes {dimension_semantics = [#tpu.dimension_semantics<parallel>], iteration_bounds = array<i64: 1>, scalar_prefetch = 0 : i64, scratch_operands = 0 : i64, tpu.core_type = #tpu.core_type<tc>, window_params = [{transform_indices = @transform_0, window_bounds = array<i64: 128, 128>}, {transform_indices = @transform_1, window_bounds = array<i64: 128, 128>}]} {
    %c0 = arith.constant 0 : index
    %c0_0 = arith.constant 0 : index
    %0 = vector.load %arg1[%c0, %c0_0] : memref<128x128xf32, #tpu.memory_space<vmem>>, vector<128x128xf32>
    %c0_1 = arith.constant 0 : index
    %c0_2 = arith.constant 0 : index
    %1 = vector.load %arg2[%c0_1, %c0_2] : memref<128x128xf32, #tpu.memory_space<vmem>>, vector<128x128xf32>
    tpu.vector_store %arg2[%c0_1, %c0_2], %0 {strides = array<i32>} : memref<128x128xf32, #tpu.memory_space<vmem>>, vector<128x128xf32>,
    return
  }
  func.func @transform_0(%arg0: i32) -> (i32, i32) {
    %c0_i32 = arith.constant 0 : i32
    %c0_i32_0 = arith.constant 0 : i32
    return %arg0, %c0_i32 : i32, i32
  }
  func.func @transform_1(%arg0: i32) -> (i32, i32) {
    %c0_i32 = arith.constant 0 : i32
    %c0_i32_0 = arith.constant 0 : i32
    return %arg0, %c0_i32 : i32, i32
  }
}

</mosaic_0001>

<llo_original>
// kernel: tpu_custom_call.1
$region0: #{tpu_custom_call.1}
  #allocation0 [shape = 'u32[]', space=smem, size = 0x4, offset = 0x4, fixed_abs, tag = 'smem constant byte address 0x4 - core index']
  #allocation1 [shape = 'u32[144,128]{1,0:T(1,128)}', space=vmem, size = 0x12000, scoped, tag = 'internal scratch']
  %s0 = inlined_call_operand.hbm [shape: f32[128,128], index: 0, kind: input, shape index: {}]
  %s1 = inlined_call_operand.hbm [shape: f32[128,128], index: 1, kind: output, shape index: {}]
  %s2 = sld [smem:[#allocation0]]
  $region18: #{tpu_custom_call.1} parent=0
    _
  %s4 = ssub.s32 1, %s2
  %s5 = scalar_select 0, %s4, %s2
  $region1: #{tpu_custom_call.1} parent=0
    #allocation2 [shape = 'u8[65536]{0}', space=vmem, size = 0x10000, scoped, tag = 'input window, operand 0, single buffered']
    #allocation3 [shape = 's32[1]{0}', space=sflag, size = 0x4, scoped, tag = 'scoped memory for tpu_custom_call.1']
    #allocation4 [shape = 's32[1]{0}', space=sflag, size = 0x4, scoped, tag = 'scoped memory for tpu_custom_call.1']
    #allocation5 [shape = 'u8[65536]{0}', space=vmem, size = 0x10000, scoped, tag = 'output window, operand 0, single buffered']
    %6 = vsyncpa [#allocation3], 0
    %7 = vsyncpa [#allocation4], 0
    // Predicated region
    $region2: #{tpu_custom_call.1} parent=1 // pred_check
      _
    $region3: #{tpu_custom_call.1} parent=1 // pred_check_branch
      %9 = sbr.rel (0) target = $region5
    $region4: #{tpu_custom_call.1} parent=1 // pred_region
      %s11 = ssub.s32 2048, 2048
      %12 = vsyncadd [#allocation3], %s11
      %s13 = sshll.u32 [#allocation2], 4
      %s14 = int_to_ptr.vmem [resolvable:$true] %s13
      %19 = dma.hbm_to_vmem [thread:$0]  %s0, 2048, %s14, [#allocation3], 128, 128, 8
    $region5: #{tpu_custom_call.1} parent=1 // pred_fallthru
      _
    // Predicated region
    $region6: #{tpu_custom_call.1} parent=1 // pred_check
      _
    $region7: #{tpu_custom_call.1} parent=1 // pred_check_branch
      %21 = sbr.rel (0) target = $region9
    $region8: #{tpu_custom_call.1} parent=1 // pred_region
      %22 = dma.done [#allocation3], 2048
    $region9: #{tpu_custom_call.1} parent=1 // pred_fallthru
      _
    %v23 = vld [vmem:[#allocation2] sm:$0xff]
    %v24 = vld [vmem:[#allocation2 + $0x8] sm:$0xff]
    %v25 = vld [vmem:[#allocation2 + $0x10] sm:$0xff]
    %v26 = vld [vmem:[#allocation2 + $0x18] sm:$0xff]
    %v27 = vld [vmem:[#allocation2 + $0x20] sm:$0xff]
    %v28 = vld [vmem:[#allocation2 + $0x28] sm:$0xff]
    %v29 = vld [vmem:[#allocation2 + $0x30] sm:$0xff]
    %v30 = vld [vmem:[#allocation2 + $0x38] sm:$0xff]
    %v31 = vld [vmem:[#allocation2 + $0x40] sm:$0xff]
    %v32 = vld [vmem:[#allocation2 + $0x48] sm:$0xff]
    %v33 = vld [vmem:[#allocation2 + $0x50] sm:$0xff]
    %v34 = vld [vmem:[#allocation2 + $0x58] sm:$0xff]
    %v35 = vld [vmem:[#allocation2 + $0x60] sm:$0xff]
    %v36 = vld [vmem:[#allocation2 + $0x68] sm:$0xff]
    %v37 = vld [vmem:[#allocation2 + $0x70] sm:$0xff]
    %v38 = vld [vmem:[#allocation2 + $0x78] sm:$0xff]
    %39 = vst [vmem:[#allocation5] sm:$0xff] %v23
    %40 = vst [vmem:[#allocation5 + $0x8] sm:$0xff] %v24
    %41 = vst [vmem:[#allocation5 + $0x10] sm:$0xff] %v25
    %42 = vst [vmem:[#allocation5 + $0x18] sm:$0xff] %v26
    %43 = vst [vmem:[#allocation5 + $0x20] sm:$0xff] %v27
    %44 = vst [vmem:[#allocation5 + $0x28] sm:$0xff] %v28
    %45 = vst [vmem:[#allocation5 + $0x30] sm:$0xff] %v29
    %46 = vst [vmem:[#allocation5 + $0x38] sm:$0xff] %v30
    %47 = vst [vmem:[#allocation5 + $0x40] sm:$0xff] %v31
    %48 = vst [vmem:[#allocation5 + $0x48] sm:$0xff] %v32
    %49 = vst [vmem:[#allocation5 + $0x50] sm:$0xff] %v33
    %50 = vst [vmem:[#allocation5 + $0x58] sm:$0xff] %v34
    %51 = vst [vmem:[#allocation5 + $0x60] sm:$0xff] %v35
    %52 = vst [vmem:[#allocation5 + $0x68] sm:$0xff] %v36
    %53 = vst [vmem:[#allocation5 + $0x70] sm:$0xff] %v37
    %54 = vst [vmem:[#allocation5 + $0x78] sm:$0xff] %v38
    // Predicated region
    $region10: #{tpu_custom_call.1} parent=1 // pred_check
      _
    $region11: #{tpu_custom_call.1} parent=1 // pred_check_branch
      %56 = sbr.rel (0) target = $region13
    $region12: #{tpu_custom_call.1} parent=1 // pred_region
      %s58 = ssub.s32 2048, 2048
      %59 = vsyncadd [#allocation4], %s58
      %s60 = sshll.u32 [#allocation5], 4
      %s61 = int_to_ptr.vmem [resolvable:$true] %s60
      %66 = dma.vmem_to_hbm [thread:$0]  %s61, 2048, %s1, [#allocation4], 128, 128, 8
    $region13: #{tpu_custom_call.1} parent=1 // pred_fallthru
      _
    // Predicated region
    $region14: #{tpu_custom_call.1} parent=1 // pred_check
      _
    $region15: #{tpu_custom_call.1} parent=1 // pred_check_branch
      %68 = sbr.rel (0) target = $region17
    $region16: #{tpu_custom_call.1} parent=1 // pred_region
      %69 = dma.done [#allocation4], 2048
    $region17: #{tpu_custom_call.1} parent=1 // pred_fallthru
      _
    %70 = vsyncpa [#allocation3], 1
    %71 = vsyncpa [#allocation4], 1

</llo_original>
